<compile_context>
chip_gen: v5e
topology: v5e:2x2
jax: 0.10.0
libtpu: 0.0.40
codegen_flags: <defaults>
</compile_context>

<pallas_src>
import functools
import numpy as np
import jax
import jax.numpy as jnp
from jax.experimental import pallas as pl
from jax.experimental.pallas import tpu as pltpu

_LANE = 128         # vreg lane width
_BF16_TILE = 16     # bf16 native sublane packing → tb multiple of 16
_TB_FLOOR = 256     # MXU pass width (v6e/v7x); also multiple of 128 (v5e) and 16
_TB_MAX = 2048      # largest batch tile we will pick
_MIN_TB = 16        # smallest batch tile we will pick

_ACTIVATIONS = {
    'ReLU': lambda x: jnp.maximum(x, 0.0),
    'Tanh': jnp.tanh,
    'Sigmoid': jax.nn.sigmoid,
    'Softplus': jax.nn.softplus,
    'LeakyReLU': lambda x: jnp.where(x >= 0, x, 0.01 * x),
    'SELU': jax.nn.selu,
}
# TODO(synk): 'PReLU' has a learnable slope parameter and is not wired up here.

_TRANSCENDENTAL_ACTS = ('Tanh', 'Sigmoid', 'Softplus', 'SELU')


def _round_up(x, m):
    return -(-x // m) * m


def _tpu_vmem_bytes():
    """Physical VMEM per TensorCore; conservative 64 MiB (v7x) fallback."""
    try:
        info = pltpu.get_tpu_info()
        for attr in ("vmem_capacity_bytes", "vmem_size_bytes", "vmem_bytes"):
            v = getattr(info, attr, None)
            if v:
                return int(v)
    except Exception:
        pass
    return 64 * 1024 * 1024


def _pool_time(x, k, mode):
    """Pool along axis 1 (time) with kernel=stride=k, ceil_mode=True (PyTorch semantics).

    Works on [B, L] or [B, L, C]; avoids the transpose->pool->transpose round trip.
    """
    B, L = x.shape[0], x.shape[1]
    Lp = -(-L // k)                      # ceil(L / k)
    pad = Lp * k - L
    pad_widths = [(0, 0), (0, pad)] + [(0, 0)] * (x.ndim - 2)
    if mode == 'MaxPool1d':
        xp = jnp.pad(x, pad_widths, constant_values=-jnp.inf)
        return xp.reshape((B, Lp, k) + x.shape[2:]).max(axis=2)
    elif mode == 'AvgPool1d':
        # PyTorch AvgPool1d(ceil_mode=True, padding=0): the clipped edge window is
        # divided by the number of valid (in-bounds) elements.
        xp = jnp.pad(x, pad_widths, constant_values=0.0)
        s = xp.reshape((B, Lp, k) + x.shape[2:]).sum(axis=2)
        counts = (jnp.minimum(jnp.arange(Lp) * k + k, L) - jnp.arange(Lp) * k).astype(x.dtype)
        counts = counts.reshape((1, Lp) + (1,) * (x.ndim - 2))
        return s / counts
    raise ValueError(mode)


def _nhits_mlp_kernel(*refs, n_linear, activation):
    """Fused MLP over one batch tile.

    refs = (x_tile, w1, b1, ..., wN, bN, theta_tile)
    Structure mirrors the PyTorch nn.Sequential:
      Linear(concat, u0)                          (no activation)
      [Linear(ui, uo); activation] per mlp_units  (dropout is identity at inference)
      Linear(u_last, n_theta)                     (no activation)
    Matmuls run bf16 x bf16 -> f32 on the MXU; bias-add / activation stay in f32.
    Output is a single lane-dense padded theta tile (split happens in the wrapper).
    """
    x_ref = refs[0]
    theta_ref = refs[-1]
    act = _ACTIVATIONS[activation]

    h = x_ref[...]                                    # bf16 [TB, F_pad]
    for i in range(n_linear):
        w = refs[1 + 2 * i][...]                      # bf16 [in_pad, out_pad]
        b = refs[2 + 2 * i][...]                      # f32  [1, out_pad]
        z = jnp.dot(h, w, preferred_element_type=jnp.float32) + b
        if 1 <= i < n_linear - 1:                     # activation after each mlp_units Linear only
            z = act(z)
        # TODO(synk): nn.Dropout is identity at inference; training-mode dropout not implemented.
        h = z.astype(jnp.bfloat16) if i < n_linear - 1 else z
    # TODO(synk): add an optional bf16 theta output variant for v5e (halves vst/HBM writeback).
    theta_ref[...] = h.astype(theta_ref.dtype)        # lane-dense [TB, T_pad]


class NHITSBlockPallas:
    """Pallas/JAX re-implementation of the PyTorch NHITSBlock (inference forward)."""

    def __init__(self, input_size, h, n_theta, mlp_units, futr_input_size,
                 hist_input_size, stat_input_size, n_pool_kernel_size,
                 pooling_mode, dropout_prob, activation, key):
        assert activation in _ACTIVATIONS, f'{activation} not supported'
        assert pooling_mode in ('MaxPool1d', 'AvgPool1d')
        # TODO(synk): the PyTorch module takes an arbitrary `basis` nn.Module; here we
        # implement the standard NHITS IdentityBasis (n_theta = input_size + h, plain split).
        assert n_theta == input_size + h, "IdentityBasis requires n_theta == input_size + h"

        self.orig_input_size = input_size
        self.h = h
        self.n_theta = n_theta
        self.k = n_pool_kernel_size
        self.pooling_mode = pooling_mode
        self.futr_input_size = futr_input_size
        self.hist_input_size = hist_input_size
        self.stat_input_size = stat_input_size
        self.activation = activation
        self.dropout_prob = dropout_prob

        pooled_hist_size = int(np.ceil(input_size / n_pool_kernel_size))
        pooled_futr_size = int(np.ceil((input_size + h) / n_pool_kernel_size))
        concat_size = (pooled_hist_size
                       + hist_input_size * pooled_hist_size
                       + futr_input_size * pooled_futr_size
                       + stat_input_size)
        self.concat_size = concat_size
        self.concat_pad = _round_up(concat_size, _LANE)   # lane-pad feature dim
        self.theta_pad = _round_up(n_theta, _LANE)        # lane-pad theta dim

        # Linear layer (in, out) shapes, matching the PyTorch nn.Sequential.
        shapes = [(concat_size, mlp_units[0][0])]
        for lin, lout in mlp_units:
            shapes.append((lin, lout))
        shapes.append((mlp_units[-1][1], n_theta))
        self.shapes = shapes
        self.n_linear = len(shapes)
        self.padded_shapes = [(_round_up(fi, _LANE), _round_up(fo, _LANE)) for fi, fo in shapes]

        # Deterministic init (uniform in +/- 1/sqrt(fan_in) over the UNPADDED shape,
        # like nn.Linear's default bound), then zero-padded to (8,128)-friendly shapes.
        # Weights stored bf16 (MXU-native), biases f32. Padded weight ROWS must stay
        # exactly zero so padded lanes of non-ReLU activations cannot leak forward.
        # TODO(synk): optional fp8 weight packing (+ per-layer scale) for v7x VMEM savings.
        params = []
        for (fin, fout), (fip, fop) in zip(shapes, self.padded_shapes):
            key, kw, kb = jax.random.split(key, 3)
            bound = 1.0 / np.sqrt(fin)
            W = jax.random.uniform(kw, (fin, fout), jnp.float32, -bound, bound)
            b = jax.random.uniform(kb, (1, fout), jnp.float32, -bound, bound)
            Wp = jnp.zeros((fip, fop), jnp.bfloat16).at[:fin, :fout].set(W.astype(jnp.bfloat16))
            bp = jnp.zeros((1, fop), jnp.float32).at[:, :fout].set(b)
            params += [Wp, bp]
        self.params = params
        self.weight_bytes = sum(int(np.prod(p.shape)) * p.dtype.itemsize for p in params)

    # ----------------------------------------------------------------- features
    def _features(self, insample_y, futr_exog, hist_exog, stat_exog, b_pad):
        """Pool + concat + bf16-cast + zero-pad to [b_pad, F_pad] (fused XLA glue)."""
        B = insample_y.shape[0]
        feats = [_pool_time(insample_y, self.k, self.pooling_mode).astype(jnp.bfloat16)]
        if self.hist_input_size > 0:
            hp = _pool_time(hist_exog, self.k, self.pooling_mode)        # [B, Lp, C]
            feats.append(hp.reshape(B, -1).astype(jnp.bfloat16))         # (time, channel) flatten
        if self.futr_input_size > 0:
            fp = _pool_time(futr_exog, self.k, self.pooling_mode)        # [B, Lfp, C]
            feats.append(fp.reshape(B, -1).astype(jnp.bfloat16))
        if self.stat_input_size > 0:
            feats.append(stat_exog.reshape(B, -1).astype(jnp.bfloat16))
        x = jnp.concatenate(feats, axis=1)                               # bf16 [B, F]
        return jnp.pad(x, ((0, b_pad - B), (0, self.concat_pad - x.shape[1])))

    # ----------------------------------------------------------------- tiling
    def _choose_tile(self, B):
        """VMEM-budget- and generation-aware batch-tile selection."""
        F_pad, T_pad = self.concat_pad, self.theta_pad
        max_hidden = max(fo for _, fo in self.padded_shapes)
        # Bytes per batch-row resident in VMEM each grid step:
        #   double-buffered bf16 x tile + double-buffered f32 theta tile
        #   + live f32 intermediate (with slack for its bf16 copy).
        per_row = 2 * F_pad * 2 + 2 * T_pad * 4 + 2 * max_hidden * 4

        phys = _tpu_vmem_bytes()
        # 64 MiB scoped limit on v5e/v6e (128 MiB physical), 32 MiB on v7x (64 MiB).
        vmem_limit = min(phys // 2, 64 * 1024 * 1024)
        min_tile_bytes = _MIN_TB * per_row
        # Weights/biases are single-buffered (pl.Buffered(1)) and resident across
        # the whole grid, so they come straight off the budget. If they are huge,
        # raise the scoped limit toward physical VMEM rather than failing.
        if self.weight_bytes + min_tile_bytes > int(0.8 * vmem_limit):
            vmem_limit = min(int(0.9 * phys),
                             self.weight_bytes + min_tile_bytes + (2 << 20))
        budget = max(int(0.8 * vmem_limit) - self.weight_bytes, min_tile_bytes)

        tb = min(_TB_MAX, budget // per_row)
        B16 = _round_up(max(B, 1), _BF16_TILE)        # bf16 native (16,128) tile
        tb = min(tb, B16)
        # Guarantee >=2 grid steps when the batch is big enough to split without
        # dropping below the MXU-friendly floor (keeps both v7x TensorCores busy).
        if B16 >= 2 * _TB_FLOOR:
            half = max(_TB_FLOOR, ((B16 // 2) // _BF16_TILE) * _BF16_TILE)
            tb = min(tb, half)
        tb = max(_MIN_TB, (tb // _BF16_TILE) * _BF16_TILE)
        B_pad = _round_up(B16, tb)
        return tb, B_pad, int(vmem_limit)

    # ----------------------------------------------------------------- forward
    def __call__(self, insample_y, futr_exog, hist_exog, stat_exog):
        B = insample_y.shape[0]
        F_pad, T_pad = self.concat_pad, self.theta_pad
        tb, B_pad, vmem_limit = self._choose_tile(B)
        grid = (B_pad // tb,)

        # Fused pool/concat/cast/pad — no f32 [B, F] feature matrix hits HBM.
        xp = self._features(insample_y, futr_exog, hist_exog, stat_exog, B_pad)

        kernel = functools.partial(
            _nhits_mlp_kernel, n_linear=self.n_linear, activation=self.activation)

        flops = 2 * B_pad * sum(fi * fo for fi, fo in self.padded_shapes)
        transcendentals = 0
        if self.activation in _TRANSCENDENTAL_ACTS:
            transcendentals = B_pad * sum(fo for _, fo in self.padded_shapes[1:-1])
        bytes_accessed = (B_pad * F_pad * 2          # bf16 features in
                          + self.weight_bytes       # weights fetched once
                          + B_pad * T_pad * 4)      # f32 theta out

        def run(single_buffer_weights):
            # x / theta tiled over the batch grid; weights & biases use a constant
            # index_map so they stay resident in VMEM across grid steps.
            in_specs = [pl.BlockSpec((tb, F_pad), lambda i: (i, 0))]
            for p in self.params:
                if single_buffer_weights:
                    # Buffered(1): drop the default double buffer on the
                    # never-changing weights — halves their VMEM footprint.
                    in_specs.append(pl.BlockSpec(p.shape, lambda i: (0, 0),
                                                 pipeline_mode=pl.Buffered(1)))
                else:
                    in_specs.append(pl.BlockSpec(p.shape, lambda i: (0, 0)))
            out_spec = pl.BlockSpec((tb, T_pad), lambda i: (i, 0))
            return pl.pallas_call(
                kernel,
                grid=grid,
                out_shape=jax.ShapeDtypeStruct((B_pad, T_pad), jnp.float32),
                in_specs=in_specs,
                out_specs=out_spec,
                compiler_params=pltpu.CompilerParams(
                    # Independent batch tiles: megacore sharding on v7x.
                    dimension_semantics=("parallel",),
                    vmem_limit_bytes=vmem_limit,
                ),
                cost_estimate=pl.CostEstimate(
                    flops=int(flops),
                    transcendentals=int(transcendentals),
                    bytes_accessed=int(bytes_accessed)),
            )(xp, *self.params)

        try:
            theta_padded = run(True)
        except Exception:
            # Fallback if pipeline_mode=pl.Buffered(1) is rejected by this runtime.
            theta_padded = run(False)

        # IdentityBasis split — free XLA slices on the lane-dense padded theta.
        theta = theta_padded[:B]
        backcast = theta[:, :self.orig_input_size]
        forecast = theta[:, self.orig_input_size:self.orig_input_size + self.h]
        return backcast, forecast


def _ref_forward(block, insample_y, futr_exog, hist_exog, stat_exog):
    """Pure-JAX reference with identical bf16-weight / f32-accumulate numerics."""
    B = insample_y.shape[0]
    h = block._features(insample_y, futr_exog, hist_exog, stat_exog, B)   # bf16 [B, F_pad]
    act = _ACTIVATIONS[block.activation]
    for i in range(block.n_linear):
        z = jnp.dot(h, block.params[2 * i],
                    preferred_element_type=jnp.float32) + block.params[2 * i + 1]
        if 1 <= i < block.n_linear - 1:
            z = act(z)
        h = z.astype(jnp.bfloat16) if i < block.n_linear - 1 else z
    L, H = block.orig_input_size, block.h
    return h[:, :L], h[:, L:L + H]


if __name__ == "__main__":
    key = jax.random.PRNGKey(0)
    B, L, H = 2, 16, 8
    C_hist, C_futr, S = 2, 2, 4
    k_pool = 2
    mlp_units = [[32, 32], [32, 32]]
    n_theta = L + H  # IdentityBasis

    key, kp, k1, k2, k3, k4 = jax.random.split(key, 6)
    block = NHITSBlockPallas(
        input_size=L, h=H, n_theta=n_theta, mlp_units=mlp_units,
        futr_input_size=C_futr, hist_input_size=C_hist, stat_input_size=S,
        n_pool_kernel_size=k_pool, pooling_mode='MaxPool1d',
        dropout_prob=0.0, activation='ReLU', key=kp,
    )

    insample_y = jax.random.normal(k1, (B, L), jnp.float32)
    futr_exog = jax.random.normal(k2, (B, L + H, C_futr), jnp.float32)
    hist_exog = jax.random.normal(k3, (B, L, C_hist), jnp.float32)
    stat_exog = jax.random.normal(k4, (B, S), jnp.float32)

    backcast, forecast = block(insample_y, futr_exog, hist_exog, stat_exog)
    jax.block_until_ready((backcast, forecast))
    assert backcast.shape == (B, L) and forecast.shape == (B, H)

    # Correctness check against a pure-JAX reference with matching numerics.
    ref_b, ref_f = _ref_forward(block, insample_y, futr_exog, hist_exog, stat_exog)
    np.testing.assert_allclose(np.asarray(backcast), np.asarray(ref_b), rtol=1e-4, atol=1e-4)
    np.testing.assert_allclose(np.asarray(forecast), np.asarray(ref_f), rtol=1e-4, atol=1e-4)

    print("KERNEL_OK")
</pallas_src>

<mosaic_0001>
module attributes {stable_mosaic.version = 11 : i64} {
  func.func @_nhits_mlp_kernel(%arg0: i32, %arg1: memref<16x128xbf16, #tpu.memory_space<vmem>>, %arg2: memref<128x128xbf16, #tpu.memory_space<vmem>>, %arg3: memref<1x128xf32, #tpu.memory_space<vmem>>, %arg4: memref<128x128xbf16, #tpu.memory_space<vmem>>, %arg5: memref<1x128xf32, #tpu.memory_space<vmem>>, %arg6: memref<128x128xbf16, #tpu.memory_space<vmem>>, %arg7: memref<1x128xf32, #tpu.memory_space<vmem>>, %arg8: memref<128x128xbf16, #tpu.memory_space<vmem>>, %arg9: memref<1x128xf32, #tpu.memory_space<vmem>>, %arg10: memref<16x128xf32, #tpu.memory_space<vmem>>) attributes {dimension_semantics = [#tpu.dimension_semantics<parallel>], iteration_bounds = array<i64: 1>, scalar_prefetch = 0 : i64, scratch_operands = 0 : i64, tpu.core_type = #tpu.core_type<tc>, window_params = [{transform_indices = @transform_0, window_bounds = array<i64: 16, 128>}, {pipeline_mode = #tpu.pipeline_mode<synchronous>, transform_indices = @transform_1, window_bounds = array<i64: 128, 128>}, {pipeline_mode = #tpu.pipeline_mode<synchronous>, transform_indices = @transform_2, window_bounds = array<i64: 1, 128>}, {pipeline_mode = #tpu.pipeline_mode<synchronous>, transform_indices = @transform_3, window_bounds = array<i64: 128, 128>}, {pipeline_mode = #tpu.pipeline_mode<synchronous>, transform_indices = @transform_4, window_bounds = array<i64: 1, 128>}, {pipeline_mode = #tpu.pipeline_mode<synchronous>, transform_indices = @transform_5, window_bounds = array<i64: 128, 128>}, {pipeline_mode = #tpu.pipeline_mode<synchronous>, transform_indices = @transform_6, window_bounds = array<i64: 1, 128>}, {pipeline_mode = #tpu.pipeline_mode<synchronous>, transform_indices = @transform_7, window_bounds = array<i64: 128, 128>}, {pipeline_mode = #tpu.pipeline_mode<synchronous>, transform_indices = @transform_8, window_bounds = array<i64: 1, 128>}, {transform_indices = @transform_9, window_bounds = array<i64: 16, 128>}]} {
    %c0 = arith.constant 0 : index
    %c0_0 = arith.constant 0 : index
    %0 = vector.load %arg1[%c0, %c0_0] : memref<16x128xbf16, #tpu.memory_space<vmem>>, vector<16x128xbf16>
    %c0_1 = arith.constant 0 : index
    %c0_2 = arith.constant 0 : index
    %1 = vector.load %arg2[%c0_1, %c0_2] : memref<128x128xbf16, #tpu.memory_space<vmem>>, vector<128x128xbf16>
    %c0_3 = arith.constant 0 : index
    %c0_4 = arith.constant 0 : index
    %2 = vector.load %arg3[%c0_3, %c0_4] : memref<1x128xf32, #tpu.memory_space<vmem>>, vector<1x128xf32>
    %cst = arith.constant dense<0.000000e+00> : vector<16x128xf32>
    %3 = tpu.matmul %0, %1, %cst {dimension_numbers = #tpu.dot_dimension_numbers<[1], [0], [0], [1], [0, 0, 1, 1], [], []>} : vector<16x128xbf16>, vector<128x128xbf16>, vector<16x128xf32> -> vector<16x128xf32>
    %4 = vector.broadcast %2 : vector<1x128xf32> to vector<16x128xf32>
    %5 = arith.addf %3, %4 : vector<16x128xf32>
    %6 = arith.truncf %5 : vector<16x128xf32> to vector<16x128xbf16>
    %c0_5 = arith.constant 0 : index
    %c0_6 = arith.constant 0 : index
    %7 = vector.load %arg4[%c0_5, %c0_6] : memref<128x128xbf16, #tpu.memory_space<vmem>>, vector<128x128xbf16>
    %c0_7 = arith.constant 0 : index
    %c0_8 = arith.constant 0 : index
    %8 = vector.load %arg5[%c0_7, %c0_8] : memref<1x128xf32, #tpu.memory_space<vmem>>, vector<1x128xf32>
    %cst_9 = arith.constant dense<0.000000e+00> : vector<16x128xf32>
    %9 = tpu.matmul %6, %7, %cst_9 {dimension_numbers = #tpu.dot_dimension_numbers<[1], [0], [0], [1], [0, 0, 1, 1], [], []>} : vector<16x128xbf16>, vector<128x128xbf16>, vector<16x128xf32> -> vector<16x128xf32>
    %10 = vector.broadcast %8 : vector<1x128xf32> to vector<16x128xf32>
    %11 = arith.addf %9, %10 : vector<16x128xf32>
    %cst_10 = arith.constant 0.000000e+00 : f32
    %12 = vector.broadcast %cst_10 : f32 to vector<16x128xf32>
    %13 = arith.maximumf %11, %12 : vector<16x128xf32>
    %14 = arith.truncf %13 : vector<16x128xf32> to vector<16x128xbf16>
    %c0_11 = arith.constant 0 : index
    %c0_12 = arith.constant 0 : index
    %15 = vector.load %arg6[%c0_11, %c0_12] : memref<128x128xbf16, #tpu.memory_space<vmem>>, vector<128x128xbf16>
    %c0_13 = arith.constant 0 : index
    %c0_14 = arith.constant 0 : index
    %16 = vector.load %arg7[%c0_13, %c0_14] : memref<1x128xf32, #tpu.memory_space<vmem>>, vector<1x128xf32>
    %cst_15 = arith.constant dense<0.000000e+00> : vector<16x128xf32>
    %17 = tpu.matmul %14, %15, %cst_15 {dimension_numbers = #tpu.dot_dimension_numbers<[1], [0], [0], [1], [0, 0, 1, 1], [], []>} : vector<16x128xbf16>, vector<128x128xbf16>, vector<16x128xf32> -> vector<16x128xf32>
    %18 = vector.broadcast %16 : vector<1x128xf32> to vector<16x128xf32>
    %19 = arith.addf %17, %18 : vector<16x128xf32>
    %cst_16 = arith.constant 0.000000e+00 : f32
    %20 = vector.broadcast %cst_16 : f32 to vector<16x128xf32>
    %21 = arith.maximumf %19, %20 : vector<16x128xf32>
    %22 = arith.truncf %21 : vector<16x128xf32> to vector<16x128xbf16>
    %c0_17 = arith.constant 0 : index
    %c0_18 = arith.constant 0 : index
    %23 = vector.load %arg8[%c0_17, %c0_18] : memref<128x128xbf16, #tpu.memory_space<vmem>>, vector<128x128xbf16>
    %c0_19 = arith.constant 0 : index
    %c0_20 = arith.constant 0 : index
    %24 = vector.load %arg9[%c0_19, %c0_20] : memref<1x128xf32, #tpu.memory_space<vmem>>, vector<1x128xf32>
    %cst_21 = arith.constant dense<0.000000e+00> : vector<16x128xf32>
    %25 = tpu.matmul %22, %23, %cst_21 {dimension_numbers = #tpu.dot_dimension_numbers<[1], [0], [0], [1], [0, 0, 1, 1], [], []>} : vector<16x128xbf16>, vector<128x128xbf16>, vector<16x128xf32> -> vector<16x128xf32>
    %26 = vector.broadcast %24 : vector<1x128xf32> to vector<16x128xf32>
    %27 = arith.addf %25, %26 : vector<16x128xf32>
    %c0_22 = arith.constant 0 : index
    %c0_23 = arith.constant 0 : index
    %28 = vector.load %arg10[%c0_22, %c0_23] : memref<16x128xf32, #tpu.memory_space<vmem>>, vector<16x128xf32>
    tpu.vector_store %arg10[%c0_22, %c0_23], %27 {strides = array<i32>} : memref<16x128xf32, #tpu.memory_space<vmem>>, vector<16x128xf32>,
    return
  }
  func.func @transform_0(%arg0: i32) -> (i32, i32) {
    %c0_i32 = arith.constant 0 : i32
    %c0_i32_0 = arith.constant 0 : i32
    return %arg0, %c0_i32 : i32, i32
  }
  func.func @transform_1(%arg0: i32) -> (i32, i32) {
    %c0_i32 = arith.constant 0 : i32
    %c0_i32_0 = arith.constant 0 : i32
    %c0_i32_1 = arith.constant 0 : i32
    return %c0_i32, %c0_i32_0 : i32, i32
  }
  func.func @transform_2(%arg0: i32) -> (i32, i32) {
    %c0_i32 = arith.constant 0 : i32
    %c0_i32_0 = arith.constant 0 : i32
    %c0_i32_1 = arith.constant 0 : i32
    return %c0_i32, %c0_i32_0 : i32, i32
  }
  func.func @transform_3(%arg0: i32) -> (i32, i32) {
    %c0_i32 = arith.constant 0 : i32
    %c0_i32_0 = arith.constant 0 : i32
    %c0_i32_1 = arith.constant 0 : i32
    return %c0_i32, %c0_i32_0 : i32, i32
  }
  func.func @transform_4(%arg0: i32) -> (i32, i32) {
    %c0_i32 = arith.constant 0 : i32
    %c0_i32_0 = arith.constant 0 : i32
    %c0_i32_1 = arith.constant 0 : i32
    return %c0_i32, %c0_i32_0 : i32, i32
  }
  func.func @transform_5(%arg0: i32) -> (i32, i32) {
    %c0_i32 = arith.constant 0 : i32
    %c0_i32_0 = arith.constant 0 : i32
    %c0_i32_1 = arith.constant 0 : i32
    return %c0_i32, %c0_i32_0 : i32, i32
  }
  func.func @transform_6(%arg0: i32) -> (i32, i32) {
    %c0_i32 = arith.constant 0 : i32
    %c0_i32_0 = arith.constant 0 : i32
    %c0_i32_1 = arith.constant 0 : i32
    return %c0_i32, %c0_i32_0 : i32, i32
  }
  func.func @transform_7(%arg0: i32) -> (i32, i32) {
    %c0_i32 = arith.constant 0 : i32
    %c0_i32_0 = arith.constant 0 : i32
    %c0_i32_1 = arith.constant 0 : i32
    return %c0_i32, %c0_i32_0 : i32, i32
  }
  func.func @transform_8(%arg0: i32) -> (i32, i32) {
    %c0_i32 = arith.constant 0 : i32
    %c0_i32_0 = arith.constant 0 : i32
    %c0_i32_1 = arith.constant 0 : i32
    return %c0_i32, %c0_i32_0 : i32, i32
  }
  func.func @transform_9(%arg0: i32) -> (i32, i32) {
    %c0_i32 = arith.constant 0 : i32
    %c0_i32_0 = arith.constant 0 : i32
    return %arg0, %c0_i32 : i32, i32
  }
}

module attributes {stable_mosaic.version = 11 : i64} {
  func.func @_nhits_mlp_kernel(%arg0: i32, %arg1: memref<16x128xbf16, #tpu.memory_space<vmem>>, %arg2: memref<128x128xbf16, #tpu.memory_space<vmem>>, %arg3: memref<1x128xf32, #tpu.memory_space<vmem>>, %arg4: memref<128x128xbf16, #tpu.memory_space<vmem>>, %arg5: memref<1x128xf32, #tpu.memory_space<vmem>>, %arg6: memref<128x128xbf16, #tpu.memory_space<vmem>>, %arg7: memref<1x128xf32, #tpu.memory_space<vmem>>, %arg8: memref<128x128xbf16, #tpu.memory_space<vmem>>, %arg9: memref<1x128xf32, #tpu.memory_space<vmem>>, %arg10: memref<16x128xf32, #tpu.memory_space<vmem>>) attributes {dimension_semantics = [#tpu.dimension_semantics<parallel>], iteration_bounds = array<i64: 1>, scalar_prefetch = 0 : i64, scratch_operands = 0 : i64, tpu.core_type = #tpu.core_type<tc>, window_params = [{transform_indices = @transform_0, window_bounds = array<i64: 16, 128>}, {pipeline_mode = #tpu.pipeline_mode<synchronous>, transform_indices = @transform_1, window_bounds = array<i64: 128, 128>}, {pipeline_mode = #tpu.pipeline_mode<synchronous>, transform_indices = @transform_2, window_bounds = array<i64: 1, 128>}, {pipeline_mode = #tpu.pipeline_mode<synchronous>, transform_indices = @transform_3, window_bounds = array<i64: 128, 128>}, {pipeline_mode = #tpu.pipeline_mode<synchronous>, transform_indices = @transform_4, window_bounds = array<i64: 1, 128>}, {pipeline_mode = #tpu.pipeline_mode<synchronous>, transform_indices = @transform_5, window_bounds = array<i64: 128, 128>}, {pipeline_mode = #tpu.pipeline_mode<synchronous>, transform_indices = @transform_6, window_bounds = array<i64: 1, 128>}, {pipeline_mode = #tpu.pipeline_mode<synchronous>, transform_indices = @transform_7, window_bounds = array<i64: 128, 128>}, {pipeline_mode = #tpu.pipeline_mode<synchronous>, transform_indices = @transform_8, window_bounds = array<i64: 1, 128>}, {transform_indices = @transform_9, window_bounds = array<i64: 16, 128>}]} {
    %c0 = arith.constant 0 : index
    %c0_0 = arith.constant 0 : index
    %0 = vector.load %arg1[%c0, %c0_0] : memref<16x128xbf16, #tpu.memory_space<vmem>>, vector<16x128xbf16>
    %c0_1 = arith.constant 0 : index
    %c0_2 = arith.constant 0 : index
    %1 = vector.load %arg2[%c0_1, %c0_2] : memref<128x128xbf16, #tpu.memory_space<vmem>>, vector<128x128xbf16>
    %c0_3 = arith.constant 0 : index
    %c0_4 = arith.constant 0 : index
    %2 = vector.load %arg3[%c0_3, %c0_4] : memref<1x128xf32, #tpu.memory_space<vmem>>, vector<1x128xf32>
    %cst = arith.constant dense<0.000000e+00> : vector<16x128xf32>
    %3 = tpu.matmul %0, %1, %cst {dimension_numbers = #tpu.dot_dimension_numbers<[1], [0], [0], [1], [0, 0, 1, 1], [], []>} : vector<16x128xbf16>, vector<128x128xbf16>, vector<16x128xf32> -> vector<16x128xf32>
    %4 = vector.broadcast %2 : vector<1x128xf32> to vector<16x128xf32>
    %5 = arith.addf %3, %4 : vector<16x128xf32>
    %6 = arith.truncf %5 : vector<16x128xf32> to vector<16x128xbf16>
    %c0_5 = arith.constant 0 : index
    %c0_6 = arith.constant 0 : index
    %7 = vector.load %arg4[%c0_5, %c0_6] : memref<128x128xbf16, #tpu.memory_space<vmem>>, vector<128x128xbf16>
    %c0_7 = arith.constant 0 : index
    %c0_8 = arith.constant 0 : index
    %8 = vector.load %arg5[%c0_7, %c0_8] : memref<1x128xf32, #tpu.memory_space<vmem>>, vector<1x128xf32>
    %cst_9 = arith.constant dense<0.000000e+00> : vector<16x128xf32>
    %9 = tpu.matmul %6, %7, %cst_9 {dimension_numbers = #tpu.dot_dimension_numbers<[1], [0], [0], [1], [0, 0, 1, 1], [], []>} : vector<16x128xbf16>, vector<128x128xbf16>, vector<16x128xf32> -> vector<16x128xf32>
    %10 = vector.broadcast %8 : vector<1x128xf32> to vector<16x128xf32>
    %11 = arith.addf %9, %10 : vector<16x128xf32>
    %cst_10 = arith.constant 0.000000e+00 : f32
    %12 = vector.broadcast %cst_10 : f32 to vector<16x128xf32>
    %13 = arith.maximumf %11, %12 : vector<16x128xf32>
    %14 = arith.truncf %13 : vector<16x128xf32> to vector<16x128xbf16>
    %c0_11 = arith.constant 0 : index
    %c0_12 = arith.constant 0 : index
    %15 = vector.load %arg6[%c0_11, %c0_12] : memref<128x128xbf16, #tpu.memory_space<vmem>>, vector<128x128xbf16>
    %c0_13 = arith.constant 0 : index
    %c0_14 = arith.constant 0 : index
    %16 = vector.load %arg7[%c0_13, %c0_14] : memref<1x128xf32, #tpu.memory_space<vmem>>, vector<1x128xf32>
    %cst_15 = arith.constant dense<0.000000e+00> : vector<16x128xf32>
    %17 = tpu.matmul %14, %15, %cst_15 {dimension_numbers = #tpu.dot_dimension_numbers<[1], [0], [0], [1], [0, 0, 1, 1], [], []>} : vector<16x128xbf16>, vector<128x128xbf16>, vector<16x128xf32> -> vector<16x128xf32>
    %18 = vector.broadcast %16 : vector<1x128xf32> to vector<16x128xf32>
    %19 = arith.addf %17, %18 : vector<16x128xf32>
    %cst_16 = arith.constant 0.000000e+00 : f32
    %20 = vector.broadcast %cst_16 : f32 to vector<16x128xf32>
    %21 = arith.maximumf %19, %20 : vector<16x128xf32>
    %22 = arith.truncf %21 : vector<16x128xf32> to vector<16x128xbf16>
    %c0_17 = arith.constant 0 : index
    %c0_18 = arith.constant 0 : index
    %23 = vector.load %arg8[%c0_17, %c0_18] : memref<128x128xbf16, #tpu.memory_space<vmem>>, vector<128x128xbf16>
    %c0_19 = arith.constant 0 : index
    %c0_20 = arith.constant 0 : index
    %24 = vector.load %arg9[%c0_19, %c0_20] : memref<1x128xf32, #tpu.memory_space<vmem>>, vector<1x128xf32>
    %cst_21 = arith.constant dense<0.000000e+00> : vector<16x128xf32>
    %25 = tpu.matmul %22, %23, %cst_21 {dimension_numbers = #tpu.dot_dimension_numbers<[1], [0], [0], [1], [0, 0, 1, 1], [], []>} : vector<16x128xbf16>, vector<128x128xbf16>, vector<16x128xf32> -> vector<16x128xf32>
    %26 = vector.broadcast %24 : vector<1x128xf32> to vector<16x128xf32>
    %27 = arith.addf %25, %26 : vector<16x128xf32>
    %c0_22 = arith.constant 0 : index
    %c0_23 = arith.constant 0 : index
    %28 = vector.load %arg10[%c0_22, %c0_23] : memref<16x128xf32, #tpu.memory_space<vmem>>, vector<16x128xf32>
    tpu.vector_store %arg10[%c0_22, %c0_23], %27 {strides = array<i32>} : memref<16x128xf32, #tpu.memory_space<vmem>>, vector<16x128xf32>,
    return
  }
  func.func @transform_0(%arg0: i32) -> (i32, i32) {
    %c0_i32 = arith.constant 0 : i32
    %c0_i32_0 = arith.constant 0 : i32
    return %arg0, %c0_i32 : i32, i32
  }
  func.func @transform_1(%arg0: i32) -> (i32, i32) {
    %c0_i32 = arith.constant 0 : i32
    %c0_i32_0 = arith.constant 0 : i32
    %c0_i32_1 = arith.constant 0 : i32
    return %c0_i32, %c0_i32_0 : i32, i32
  }
  func.func @transform_2(%arg0: i32) -> (i32, i32) {
    %c0_i32 = arith.constant 0 : i32
    %c0_i32_0 = arith.constant 0 : i32
    %c0_i32_1 = arith.constant 0 : i32
    return %c0_i32, %c0_i32_0 : i32, i32
  }
  func.func @transform_3(%arg0: i32) -> (i32, i32) {
    %c0_i32 = arith.constant 0 : i32
    %c0_i32_0 = arith.constant 0 : i32
    %c0_i32_1 = arith.constant 0 : i32
    return %c0_i32, %c0_i32_0 : i32, i32
  }
  func.func @transform_4(%arg0: i32) -> (i32, i32) {
    %c0_i32 = arith.constant 0 : i32
    %c0_i32_0 = arith.constant 0 : i32
    %c0_i32_1 = arith.constant 0 : i32
    return %c0_i32, %c0_i32_0 : i32, i32
  }
  func.func @transform_5(%arg0: i32) -> (i32, i32) {
    %c0_i32 = arith.constant 0 : i32
    %c0_i32_0 = arith.constant 0 : i32
    %c0_i32_1 = arith.constant 0 : i32
    return %c0_i32, %c0_i32_0 : i32, i32
  }
  func.func @transform_6(%arg0: i32) -> (i32, i32) {
    %c0_i32 = arith.constant 0 : i32
    %c0_i32_0 = arith.constant 0 : i32
    %c0_i32_1 = arith.constant 0 : i32
    return %c0_i32, %c0_i32_0 : i32, i32
  }
  func.func @transform_7(%arg0: i32) -> (i32, i32) {
    %c0_i32 = arith.constant 0 : i32
    %c0_i32_0 = arith.constant 0 : i32
    %c0_i32_1 = arith.constant 0 : i32
    return %c0_i32, %c0_i32_0 : i32, i32
  }
  func.func @transform_8(%arg0: i32) -> (i32, i32) {
    %c0_i32 = arith.constant 0 : i32
    %c0_i32_0 = arith.constant 0 : i32
    %c0_i32_1 = arith.constant 0 : i32
    return %c0_i32, %c0_i32_0 : i32, i32
  }
  func.func @transform_9(%arg0: i32) -> (i32, i32) {
    %c0_i32 = arith.constant 0 : i32
    %c0_i32_0 = arith.constant 0 : i32
    return %arg0, %c0_i32 : i32, i32
  }
}

</mosaic_0001>

<llo_original>
// kernel: tpu_custom_call.1
$region0: #{tpu_custom_call.1}
  #allocation0 [shape = 'u32[]', space=smem, size = 0x4, offset = 0x4, fixed_abs, tag = 'smem constant byte address 0x4 - core index']
  #allocation1 [shape = 'u32[72,128]{1,0:T(1,128)}', space=vmem, size = 0x9000, scoped, tag = 'internal scratch']
  %s0 = inlined_call_operand.hbm [shape: bf16[16,128], index: 0, kind: input, shape index: {}]
  %s1 = inlined_call_operand.hbm [shape: bf16[128,128], index: 1, kind: input, shape index: {}]
  %s2 = inlined_call_operand.vmem [shape: f32[1,128], index: 2, kind: input, shape index: {}]
  %s3 = inlined_call_operand.hbm [shape: bf16[128,128], index: 3, kind: input, shape index: {}]
  %s4 = inlined_call_operand.vmem [shape: f32[1,128], index: 4, kind: input, shape index: {}]
  %s5 = inlined_call_operand.hbm [shape: bf16[128,128], index: 5, kind: input, shape index: {}]
  %s6 = inlined_call_operand.vmem [shape: f32[1,128], index: 6, kind: input, shape index: {}]
  %s7 = inlined_call_operand.hbm [shape: bf16[128,128], index: 7, kind: input, shape index: {}]
  %s8 = inlined_call_operand.vmem [shape: f32[1,128], index: 8, kind: input, shape index: {}]
  %s9 = inlined_call_operand.hbm [shape: f32[16,128], index: 9, kind: output, shape index: {}]
  %s10 = sld [smem:[#allocation0]]
  $region66: #{tpu_custom_call.1} parent=0
    _
  %s12 = ssub.s32 1, %s10
  %s13 = scalar_select 0, %s12, %s10
  $region1: #{tpu_custom_call.1} parent=0
    #allocation2 [shape = 'u8[4096]{0}', space=vmem, size = 0x1000, scoped, tag = 'input window, operand 0, single buffered']
    #allocation3 [shape = 's32[1]{0}', space=sflag, size = 0x4, scoped, tag = 'scoped memory for tpu_custom_call.1']
    #allocation4 [shape = 's32[1]{0}', space=sflag, size = 0x4, scoped, tag = 'scoped memory for tpu_custom_call.1']
    #allocation5 [shape = 'u8[32768]{0}', space=vmem, size = 0x8000, scoped, tag = 'input window, operand 1, single buffered']
    #allocation6 [shape = 's32[1]{0}', space=sflag, size = 0x4, scoped, tag = 'scoped memory for tpu_custom_call.1']
    #allocation7 [shape = 'u8[32768]{0}', space=vmem, size = 0x8000, scoped, tag = 'input window, operand 3, single buffered']
    #allocation8 [shape = 'u8[32768]{0}', space=vmem, size = 0x8000, scoped, tag = 'input window, operand 5, single buffered']
    #allocation9 [shape = 's32[1]{0}', space=sflag, size = 0x4, scoped, tag = 'scoped memory for tpu_custom_call.1']
    #allocation10 [shape = 'u8[32768]{0}', space=vmem, size = 0x8000, scoped, tag = 'input window, operand 7, single buffered']
    #allocation11 [shape = 'u8[8192]{0}', space=vmem, size = 0x2000, scoped, tag = 'output window, operand 0, single buffered']
    %14 = vsyncpa [#allocation3], 0
    %15 = vsyncpa [#allocation6], 0
    %16 = vsyncpa [#allocation9], 0
    %17 = vsyncpa [#allocation4], 0
    // Predicated region
    $region2: #{tpu_custom_call.1} parent=1 // pred_check
      _
    $region3: #{tpu_custom_call.1} parent=1 // pred_check_branch
      %19 = sbr.rel (0) target = $region5
    $region4: #{tpu_custom_call.1} parent=1 // pred_region
      %21 = vsyncadd [#allocation3], 0
      %s22 = sshll.u32 %s0, 4
      %s23 = int_to_ptr.hbm [resolvable:$true] %s22
      %s24 = sshll.u32 [#allocation2], 4
      %s25 = int_to_ptr.vmem [resolvable:$true] %s24
      %30 = dma.hbm_to_vmem [thread:$0]  %s23, 128, %s25, [#allocation3], 64, 64, 4
    $region5: #{tpu_custom_call.1} parent=1 // pred_fallthru
      _
    // Predicated region
    $region6: #{tpu_custom_call.1} parent=1 // pred_check
      _
    $region7: #{tpu_custom_call.1} parent=1 // pred_check_branch
      %32 = sbr.rel (0) target = $region9
    $region8: #{tpu_custom_call.1} parent=1 // pred_region
      %34 = vsyncadd [#allocation6], 0
      %s35 = sshll.u32 %s1, 4
      %s36 = int_to_ptr.hbm [resolvable:$true] %s35
      %s37 = sshll.u32 [#allocation5], 4
      %s38 = int_to_ptr.vmem [resolvable:$true] %s37
      %43 = dma.hbm_to_vmem [thread:$0]  %s36, 1024, %s38, [#allocation6], 64, 64, 4
    $region9: #{tpu_custom_call.1} parent=1 // pred_fallthru
      _
    // Predicated region
    $region10: #{tpu_custom_call.1} parent=1 // pred_check
      _
    $region11: #{tpu_custom_call.1} parent=1 // pred_check_branch
      %45 = sbr.rel (0) target = $region13
    $region12: #{tpu_custom_call.1} parent=1 // pred_region
      _
    $region13: #{tpu_custom_call.1} parent=1 // pred_fallthru
      _
    // Predicated region
    $region14: #{tpu_custom_call.1} parent=1 // pred_check
      _
    $region15: #{tpu_custom_call.1} parent=1 // pred_check_branch
      %47 = sbr.rel (0) target = $region17
    $region16: #{tpu_custom_call.1} parent=1 // pred_region
      %49 = vsyncadd [#allocation6], 0
      %s50 = sshll.u32 %s3, 4
      %s51 = int_to_ptr.hbm [resolvable:$true] %s50
      %s52 = sshll.u32 [#allocation7], 4
      %s53 = int_to_ptr.vmem [resolvable:$true] %s52
      %58 = dma.hbm_to_vmem [thread:$0]  %s51, 1024, %s53, [#allocation6], 64, 64, 4
    $region17: #{tpu_custom_call.1} parent=1 // pred_fallthru
      _
    // Predicated region
    $region18: #{tpu_custom_call.1} parent=1 // pred_check
      _
    $region19: #{tpu_custom_call.1} parent=1 // pred_check_branch
      %60 = sbr.rel (0) target = $region21
    $region20: #{tpu_custom_call.1} parent=1 // pred_region
      _
    $region21: #{tpu_custom_call.1} parent=1 // pred_fallthru
      _
    // Predicated region
    $region22: #{tpu_custom_call.1} parent=1 // pred_check
      _
    $region23: #{tpu_custom_call.1} parent=1 // pred_check_branch
      %62 = sbr.rel (0) target = $region25
    $region24: #{tpu_custom_call.1} parent=1 // pred_region
      %64 = vsyncadd [#allocation9], 0
      %s65 = sshll.u32 %s5, 4
      %s66 = int_to_ptr.hbm [resolvable:$true] %s65
      %s67 = sshll.u32 [#allocation8], 4
      %s68 = int_to_ptr.vmem [resolvable:$true] %s67
      %73 = dma.hbm_to_vmem [thread:$0]  %s66, 1024, %s68, [#allocation9], 64, 64, 4
    $region25: #{tpu_custom_call.1} parent=1 // pred_fallthru
      _
    // Predicated region
    $region26: #{tpu_custom_call.1} parent=1 // pred_check
      _
    $region27: #{tpu_custom_call.1} parent=1 // pred_check_branch
      %75 = sbr.rel (0) target = $region29
    $region28: #{tpu_custom_call.1} parent=1 // pred_region
      _
    $region29: #{tpu_custom_call.1} parent=1 // pred_fallthru
      _
    // Predicated region
    $region30: #{tpu_custom_call.1} parent=1 // pred_check
      _
    $region31: #{tpu_custom_call.1} parent=1 // pred_check_branch
      %77 = sbr.rel (0) target = $region33
    $region32: #{tpu_custom_call.1} parent=1 // pred_region
      %79 = vsyncadd [#allocation9], 0
      %s80 = sshll.u32 %s7, 4
      %s81 = int_to_ptr.hbm [resolvable:$true] %s80
      %s82 = sshll.u32 [#allocation10], 4
      %s83 = int_to_ptr.vmem [resolvable:$true] %s82
      %88 = dma.hbm_to_vmem [thread:$0]  %s81, 1024, %s83, [#allocation9], 64, 64, 4
    $region33: #{tpu_custom_call.1} parent=1 // pred_fallthru
      _
    // Predicated region
    $region34: #{tpu_custom_call.1} parent=1 // pred_check
      _
    $region35: #{tpu_custom_call.1} parent=1 // pred_check_branch
      %90 = sbr.rel (0) target = $region37
    $region36: #{tpu_custom_call.1} parent=1 // pred_region
      _
    $region37: #{tpu_custom_call.1} parent=1 // pred_fallthru
      _
    // Predicated region
    $region38: #{tpu_custom_call.1} parent=1 // pred_check
      _
    $region39: #{tpu_custom_call.1} parent=1 // pred_check_branch
      %92 = sbr.rel (0) target = $region41
    $region40: #{tpu_custom_call.1} parent=1 // pred_region
      %94 = dma.done [#allocation3], 128
    $region41: #{tpu_custom_call.1} parent=1 // pred_fallthru
      _
    // Predicated region
    $region42: #{tpu_custom_call.1} parent=1 // pred_check
      _
    $region43: #{tpu_custom_call.1} parent=1 // pred_check_branch
      %96 = sbr.rel (0) target = $region45
    $region44: #{tpu_custom_call.1} parent=1 // pred_region
      %98 = dma.done [#allocation6], 1024
    $region45: #{tpu_custom_call.1} parent=1 // pred_fallthru
      _
    // Predicated region
    $region46: #{tpu_custom_call.1} parent=1 // pred_check
      _
    $region47: #{tpu_custom_call.1} parent=1 // pred_check_branch
      %100 = sbr.rel (0) target = $region49
    $region48: #{tpu_custom_call.1} parent=1 // pred_region
      %102 = dma.done [#allocation6], 1024
    $region49: #{tpu_custom_call.1} parent=1 // pred_fallthru
      _
    // Predicated region
    $region50: #{tpu_custom_call.1} parent=1 // pred_check
      _
    $region51: #{tpu_custom_call.1} parent=1 // pred_check_branch
      %104 = sbr.rel (0) target = $region53
    $region52: #{tpu_custom_call.1} parent=1 // pred_region
      %106 = dma.done [#allocation9], 1024
    $region53: #{tpu_custom_call.1} parent=1 // pred_fallthru
      _
    // Predicated region
    $region54: #{tpu_custom_call.1} parent=1 // pred_check
      _
    $region55: #{tpu_custom_call.1} parent=1 // pred_check_branch
      %108 = sbr.rel (0) target = $region57
    $region56: #{tpu_custom_call.1} parent=1 // pred_region
      %110 = dma.done [#allocation9], 1024
    $region57: #{tpu_custom_call.1} parent=1 // pred_fallthru
      _
    %v111 = vld [vmem:[#allocation2] sm:$0xf]
    %v112 = vld [vmem:[#allocation2 + $0x4] sm:$0xf]
    %v113 = vld [vmem:[#allocation5] sm:$0xf]
    %v114 = vld [vmem:[#allocation5 + $0x4] sm:$0xf]
    %v115 = vld [vmem:[#allocation5 + $0x8] sm:$0xf]
    %v116 = vld [vmem:[#allocation5 + $0xc] sm:$0xf]
    %v117 = vld [vmem:[#allocation5 + $0x10] sm:$0xf]
    %v118 = vld [vmem:[#allocation5 + $0x14] sm:$0xf]
    %v119 = vld [vmem:[#allocation5 + $0x18] sm:$0xf]
    %v120 = vld [vmem:[#allocation5 + $0x1c] sm:$0xf]
    %v121 = vld [vmem:[#allocation5 + $0x20] sm:$0xf]
    %v122 = vld [vmem:[#allocation5 + $0x24] sm:$0xf]
    %v123 = vld [vmem:[#allocation5 + $0x28] sm:$0xf]
    %v124 = vld [vmem:[#allocation5 + $0x2c] sm:$0xf]
    %v125 = vld [vmem:[#allocation5 + $0x30] sm:$0xf]
    %v126 = vld [vmem:[#allocation5 + $0x34] sm:$0xf]
    %v127 = vld [vmem:[#allocation5 + $0x38] sm:$0xf]
    %v128 = vld [vmem:[#allocation5 + $0x3c] sm:$0xf]
    %v129 = vld [vmem:[%s2] sm:$0x1]
    %v131 = vperm.slane %v129, 0
    %v135 = vunpack.c.l.b16 %v111
    %v136 = vunpack.c.l.b16 %v112
    %v137 = vpack.c.b16 %v136, %v135
    %v155 = vunpack.c.l.b16 %v113
    %v156 = vunpack.c.l.b16 %v114
    %v157 = vunpack.c.l.b16 %v115
    %v158 = vunpack.c.l.b16 %v116
    %v159 = vunpack.c.l.b16 %v117
    %v160 = vunpack.c.l.b16 %v118
    %v161 = vunpack.c.l.b16 %v119
    %v162 = vunpack.c.l.b16 %v120
    %v163 = vunpack.c.l.b16 %v121
    %v164 = vunpack.c.l.b16 %v122
    %v165 = vunpack.c.l.b16 %v123
    %v166 = vunpack.c.l.b16 %v124
    %v167 = vunpack.c.l.b16 %v125
    %v168 = vunpack.c.l.b16 %v126
    %v169 = vunpack.c.l.b16 %v127
    %v170 = vunpack.c.l.b16 %v128
    %v171 = vpack.c.b16 %v156, %v155
    %v172 = vpack.c.b16 %v158, %v157
    %v173 = vpack.c.b16 %v160, %v159
    %v174 = vpack.c.b16 %v162, %v161
    %v175 = vpack.c.b16 %v164, %v163
    %v176 = vpack.c.b16 %v166, %v165
    %v177 = vpack.c.b16 %v168, %v167
    %v178 = vpack.c.b16 %v170, %v169
    %187 = vmatpush.bf16.msra.mxu0 %v178
    %188 = vmatpush.bf16.msra.mxu0 %v177
    %189 = vmatpush.bf16.msra.mxu0 %v176
    %190 = vmatpush.bf16.msra.mxu0 %v175
    %191 = vmatpush.bf16.msra.mxu0 %v174
    %192 = vmatpush.bf16.msra.mxu0 %v173
    %193 = vmatpush.bf16.msra.mxu0 %v172
    %194 = vmatpush.bf16.msra.mxu0 %v171
    %195 = vmatmul.bf16.gmra.mxu0 %v137
    %v196 = vpop.f32.mrf.mxu0
    %v197 = vadd.f32 %v131, %v196
    %v198 = vpop.f32.mrf.mxu0
    %v199 = vadd.f32 %v131, %v198
    %200 = vdwg.mxu0
    %v201 = vpack.c.bf16 %v199, %v197
    %v202 = vld [vmem:[#allocation7] sm:$0xf]
    %v203 = vld [vmem:[#allocation7 + $0x4] sm:$0xf]
    %v204 = vld [vmem:[#allocation7 + $0x8] sm:$0xf]
    %v205 = vld [vmem:[#allocation7 + $0xc] sm:$0xf]
    %v206 = vld [vmem:[#allocation7 + $0x10] sm:$0xf]
    %v207 = vld [vmem:[#allocation7 + $0x14] sm:$0xf]
    %v208 = vld [vmem:[#allocation7 + $0x18] sm:$0xf]
    %v209 = vld [vmem:[#allocation7 + $0x1c] sm:$0xf]
    %v210 = vld [vmem:[#allocation7 + $0x20] sm:$0xf]
    %v211 = vld [vmem:[#allocation7 + $0x24] sm:$0xf]
    %v212 = vld [vmem:[#allocation7 + $0x28] sm:$0xf]
    %v213 = vld [vmem:[#allocation7 + $0x2c] sm:$0xf]
    %v214 = vld [vmem:[#allocation7 + $0x30] sm:$0xf]
    %v215 = vld [vmem:[#allocation7 + $0x34] sm:$0xf]
    %v216 = vld [vmem:[#allocation7 + $0x38] sm:$0xf]
    %v217 = vld [vmem:[#allocation7 + $0x3c] sm:$0xf]
    %v218 = vld [vmem:[%s4] sm:$0x1]
    %v220 = vperm.slane %v218, 0
    %v238 = vunpack.c.l.b16 %v202
    %v239 = vunpack.c.l.b16 %v203
    %v240 = vunpack.c.l.b16 %v204
    %v241 = vunpack.c.l.b16 %v205
    %v242 = vunpack.c.l.b16 %v206
    %v243 = vunpack.c.l.b16 %v207
    %v244 = vunpack.c.l.b16 %v208
    %v245 = vunpack.c.l.b16 %v209
    %v246 = vunpack.c.l.b16 %v210
    %v247 = vunpack.c.l.b16 %v211
    %v248 = vunpack.c.l.b16 %v212
    %v249 = vunpack.c.l.b16 %v213
    %v250 = vunpack.c.l.b16 %v214
    %v251 = vunpack.c.l.b16 %v215
    %v252 = vunpack.c.l.b16 %v216
    %v253 = vunpack.c.l.b16 %v217
    %v254 = vpack.c.b16 %v239, %v238
    %v255 = vpack.c.b16 %v241, %v240
    %v256 = vpack.c.b16 %v243, %v242
    %v257 = vpack.c.b16 %v245, %v244
    %v258 = vpack.c.b16 %v247, %v246
    %v259 = vpack.c.b16 %v249, %v248
    %v260 = vpack.c.b16 %v251, %v250
    %v261 = vpack.c.b16 %v253, %v252
    %270 = vmatpush.bf16.msra.mxu0 %v261
    %271 = vmatpush.bf16.msra.mxu0 %v260
    %272 = vmatpush.bf16.msra.mxu0 %v259
    %273 = vmatpush.bf16.msra.mxu0 %v258
    %274 = vmatpush.bf16.msra.mxu0 %v257
    %275 = vmatpush.bf16.msra.mxu0 %v256
    %276 = vmatpush.bf16.msra.mxu0 %v255
    %277 = vmatpush.bf16.msra.mxu0 %v254
    %278 = vmatmul.bf16.gmra.mxu0 %v201
    %v279 = vpop.f32.mrf.mxu0
    %v280 = vadd.f32 %v220, %v279
    %v281 = vpop.f32.mrf.mxu0
    %v282 = vadd.f32 %v220, %v281
    %283 = vdwg.mxu0
    %v284 = vmax.f32 %v280, 0.0
    %v285 = vmax.f32 %v282, 0.0
    %v286 = vpack.c.bf16 %v285, %v284
    %v287 = vld [vmem:[#allocation8] sm:$0xf]
    %v288 = vld [vmem:[#allocation8 + $0x4] sm:$0xf]
    %v289 = vld [vmem:[#allocation8 + $0x8] sm:$0xf]
    %v290 = vld [vmem:[#allocation8 + $0xc] sm:$0xf]
    %v291 = vld [vmem:[#allocation8 + $0x10] sm:$0xf]
    %v292 = vld [vmem:[#allocation8 + $0x14] sm:$0xf]
    %v293 = vld [vmem:[#allocation8 + $0x18] sm:$0xf]
    %v294 = vld [vmem:[#allocation8 + $0x1c] sm:$0xf]
    %v295 = vld [vmem:[#allocation8 + $0x20] sm:$0xf]
    %v296 = vld [vmem:[#allocation8 + $0x24] sm:$0xf]
    %v297 = vld [vmem:[#allocation8 + $0x28] sm:$0xf]
    %v298 = vld [vmem:[#allocation8 + $0x2c] sm:$0xf]
    %v299 = vld [vmem:[#allocation8 + $0x30] sm:$0xf]
    %v300 = vld [vmem:[#allocation8 + $0x34] sm:$0xf]
    %v301 = vld [vmem:[#allocation8 + $0x38] sm:$0xf]
    %v302 = vld [vmem:[#allocation8 + $0x3c] sm:$0xf]
    %v303 = vld [vmem:[%s6] sm:$0x1]
    %v305 = vperm.slane %v303, 0
    %v323 = vunpack.c.l.b16 %v287
    %v324 = vunpack.c.l.b16 %v288
    %v325 = vunpack.c.l.b16 %v289
    %v326 = vunpack.c.l.b16 %v290
    %v327 = vunpack.c.l.b16 %v291
    %v328 = vunpack.c.l.b16 %v292
    %v329 = vunpack.c.l.b16 %v293
    %v330 = vunpack.c.l.b16 %v294
    %v331 = vunpack.c.l.b16 %v295
    %v332 = vunpack.c.l.b16 %v296
    %v333 = vunpack.c.l.b16 %v297
    %v334 = vunpack.c.l.b16 %v298
    %v335 = vunpack.c.l.b16 %v299
    %v336 = vunpack.c.l.b16 %v300
    %v337 = vunpack.c.l.b16 %v301
    %v338 = vunpack.c.l.b16 %v302
    %v339 = vpack.c.b16 %v324, %v323
    %v340 = vpack.c.b16 %v326, %v325
    %v341 = vpack.c.b16 %v328, %v327
    %v342 = vpack.c.b16 %v330, %v329
    %v343 = vpack.c.b16 %v332, %v331
    %v344 = vpack.c.b16 %v334, %v333
    %v345 = vpack.c.b16 %v336, %v335
    %v346 = vpack.c.b16 %v338, %v337
    %355 = vmatpush.bf16.msra.mxu0 %v346
    %356 = vmatpush.bf16.msra.mxu0 %v345
    %357 = vmatpush.bf16.msra.mxu0 %v344
    %358 = vmatpush.bf16.msra.mxu0 %v343
    %359 = vmatpush.bf16.msra.mxu0 %v342
    %360 = vmatpush.bf16.msra.mxu0 %v341
    %361 = vmatpush.bf16.msra.mxu0 %v340
    %362 = vmatpush.bf16.msra.mxu0 %v339
    %363 = vmatmul.bf16.gmra.mxu0 %v286
    %v364 = vpop.f32.mrf.mxu0
    %v365 = vadd.f32 %v305, %v364
    %v366 = vpop.f32.mrf.mxu0
    %v367 = vadd.f32 %v305, %v366
    %368 = vdwg.mxu0
    %v369 = vmax.f32 %v365, 0.0
    %v370 = vmax.f32 %v367, 0.0
    %v371 = vpack.c.bf16 %v370, %v369
    %v372 = vld [vmem:[#allocation10] sm:$0xf]
    %v373 = vld [vmem:[#allocation10 + $0x4] sm:$0xf]
    %v374 = vld [vmem:[#allocation10 + $0x8] sm:$0xf]
    %v375 = vld [vmem:[#allocation10 + $0xc] sm:$0xf]
    %v376 = vld [vmem:[#allocation10 + $0x10] sm:$0xf]
    %v377 = vld [vmem:[#allocation10 + $0x14] sm:$0xf]
    %v378 = vld [vmem:[#allocation10 + $0x18] sm:$0xf]
    %v379 = vld [vmem:[#allocation10 + $0x1c] sm:$0xf]
    %v380 = vld [vmem:[#allocation10 + $0x20] sm:$0xf]
    %v381 = vld [vmem:[#allocation10 + $0x24] sm:$0xf]
    %v382 = vld [vmem:[#allocation10 + $0x28] sm:$0xf]
    %v383 = vld [vmem:[#allocation10 + $0x2c] sm:$0xf]
    %v384 = vld [vmem:[#allocation10 + $0x30] sm:$0xf]
    %v385 = vld [vmem:[#allocation10 + $0x34] sm:$0xf]
    %v386 = vld [vmem:[#allocation10 + $0x38] sm:$0xf]
    %v387 = vld [vmem:[#allocation10 + $0x3c] sm:$0xf]
    %v388 = vld [vmem:[%s8] sm:$0x1]
    %v390 = vperm.slane %v388, 0
    %v408 = vunpack.c.l.b16 %v372
    %v409 = vunpack.c.l.b16 %v373
    %v410 = vunpack.c.l.b16 %v374
    %v411 = vunpack.c.l.b16 %v375
    %v412 = vunpack.c.l.b16 %v376
    %v413 = vunpack.c.l.b16 %v377
    %v414 = vunpack.c.l.b16 %v378
    %v415 = vunpack.c.l.b16 %v379
    %v416 = vunpack.c.l.b16 %v380
    %v417 = vunpack.c.l.b16 %v381
    %v418 = vunpack.c.l.b16 %v382
    %v419 = vunpack.c.l.b16 %v383
    %v420 = vunpack.c.l.b16 %v384
    %v421 = vunpack.c.l.b16 %v385
    %v422 = vunpack.c.l.b16 %v386
    %v423 = vunpack.c.l.b16 %v387
    %v424 = vpack.c.b16 %v409, %v408
    %v425 = vpack.c.b16 %v411, %v410
    %v426 = vpack.c.b16 %v413, %v412
    %v427 = vpack.c.b16 %v415, %v414
    %v428 = vpack.c.b16 %v417, %v416
    %v429 = vpack.c.b16 %v419, %v418
    %v430 = vpack.c.b16 %v421, %v420
    %v431 = vpack.c.b16 %v423, %v422
    %440 = vmatpush.bf16.msra.mxu0 %v431
    %441 = vmatpush.bf16.msra.mxu0 %v430
    %442 = vmatpush.bf16.msra.mxu0 %v429
    %443 = vmatpush.bf16.msra.mxu0 %v428
    %444 = vmatpush.bf16.msra.mxu0 %v427
    %445 = vmatpush.bf16.msra.mxu0 %v426
    %446 = vmatpush.bf16.msra.mxu0 %v425
    %447 = vmatpush.bf16.msra.mxu0 %v424
    %448 = vmatmul.bf16.gmra.mxu0 %v371
    %v449 = vpop.f32.mrf.mxu0
    %v450 = vadd.f32 %v390, %v449
    %v451 = vpop.f32.mrf.mxu0
    %v452 = vadd.f32 %v390, %v451
    %453 = vdwg.mxu0
    %454 = vst [vmem:[#allocation11] sm:$0xff] %v450
    %455 = vst [vmem:[#allocation11 + $0x8] sm:$0xff] %v452
    // Predicated region
    $region58: #{tpu_custom_call.1} parent=1 // pred_check
      _
    $region59: #{tpu_custom_call.1} parent=1 // pred_check_branch
      %457 = sbr.rel (0) target = $region61
    $region60: #{tpu_custom_call.1} parent=1 // pred_region
      %459 = vsyncadd [#allocation4], 0
      %s460 = sshll.u32 [#allocation11], 4
      %s461 = int_to_ptr.vmem [resolvable:$true] %s460
      %s462 = sshll.u32 %s9, 4
      %s463 = int_to_ptr.hbm [resolvable:$true] %s462
      %468 = dma.vmem_to_hbm [thread:$0]  %s461, 256, %s463, [#allocation4], 128, 128, 8
    $region61: #{tpu_custom_call.1} parent=1 // pred_fallthru
      _
    // Predicated region
    $region62: #{tpu_custom_call.1} parent=1 // pred_check
      _
    $region63: #{tpu_custom_call.1} parent=1 // pred_check_branch
      %470 = sbr.rel (0) target = $region65
    $region64: #{tpu_custom_call.1} parent=1 // pred_region
      %472 = dma.done [#allocation4], 256
    $region65: #{tpu_custom_call.1} parent=1 // pred_fallthru
      _
    %473 = vsyncpa [#allocation3], 1
    %474 = vsyncpa [#allocation6], 1
    %475 = vsyncpa [#allocation9], 1
    %476 = vsyncpa [#allocation4], 1

// kernel: tpu_custom_call.1
$region0: #{tpu_custom_call.1}
  #allocation0 [shape = 'u32[]', space=smem, size = 0x4, offset = 0x4, fixed_abs, tag = 'smem constant byte address 0x4 - core index']
  #allocation1 [shape = 'u32[72,128]{1,0:T(1,128)}', space=vmem, size = 0x9000, scoped, tag = 'internal scratch']
  %s0 = inlined_call_operand.hbm [shape: bf16[16,128], index: 0, kind: input, shape index: {}]
  %s1 = inlined_call_operand.hbm [shape: bf16[128,128], index: 1, kind: input, shape index: {}]
  %s2 = inlined_call_operand.vmem [shape: f32[1,128], index: 2, kind: input, shape index: {}]
  %s3 = inlined_call_operand.hbm [shape: bf16[128,128], index: 3, kind: input, shape index: {}]
  %s4 = inlined_call_operand.vmem [shape: f32[1,128], index: 4, kind: input, shape index: {}]
  %s5 = inlined_call_operand.hbm [shape: bf16[128,128], index: 5, kind: input, shape index: {}]
  %s6 = inlined_call_operand.vmem [shape: f32[1,128], index: 6, kind: input, shape index: {}]
  %s7 = inlined_call_operand.hbm [shape: bf16[128,128], index: 7, kind: input, shape index: {}]
  %s8 = inlined_call_operand.vmem [shape: f32[1,128], index: 8, kind: input, shape index: {}]
  %s9 = inlined_call_operand.hbm [shape: f32[16,128], index: 9, kind: output, shape index: {}]
  %s10 = sld [smem:[#allocation0]]
  $region66: #{tpu_custom_call.1} parent=0
    _
  %s12 = ssub.s32 1, %s10
  %s13 = scalar_select 0, %s12, %s10
  $region1: #{tpu_custom_call.1} parent=0
    #allocation2 [shape = 'u8[4096]{0}', space=vmem, size = 0x1000, scoped, tag = 'input window, operand 0, single buffered']
    #allocation3 [shape = 's32[1]{0}', space=sflag, size = 0x4, scoped, tag = 'scoped memory for tpu_custom_call.1']
    #allocation4 [shape = 's32[1]{0}', space=sflag, size = 0x4, scoped, tag = 'scoped memory for tpu_custom_call.1']
    #allocation5 [shape = 'u8[32768]{0}', space=vmem, size = 0x8000, scoped, tag = 'input window, operand 1, single buffered']
    #allocation6 [shape = 's32[1]{0}', space=sflag, size = 0x4, scoped, tag = 'scoped memory for tpu_custom_call.1']
    #allocation7 [shape = 'u8[32768]{0}', space=vmem, size = 0x8000, scoped, tag = 'input window, operand 3, single buffered']
    #allocation8 [shape = 'u8[32768]{0}', space=vmem, size = 0x8000, scoped, tag = 'input window, operand 5, single buffered']
    #allocation9 [shape = 's32[1]{0}', space=sflag, size = 0x4, scoped, tag = 'scoped memory for tpu_custom_call.1']
    #allocation10 [shape = 'u8[32768]{0}', space=vmem, size = 0x8000, scoped, tag = 'input window, operand 7, single buffered']
    #allocation11 [shape = 'u8[8192]{0}', space=vmem, size = 0x2000, scoped, tag = 'output window, operand 0, single buffered']
    %14 = vsyncpa [#allocation3], 0
    %15 = vsyncpa [#allocation6], 0
    %16 = vsyncpa [#allocation9], 0
    %17 = vsyncpa [#allocation4], 0
    // Predicated region
    $region2: #{tpu_custom_call.1} parent=1 // pred_check
      _
    $region3: #{tpu_custom_call.1} parent=1 // pred_check_branch
      %19 = sbr.rel (0) target = $region5
    $region4: #{tpu_custom_call.1} parent=1 // pred_region
      %21 = vsyncadd [#allocation3], 0
      %s22 = sshll.u32 %s0, 4
      %s23 = int_to_ptr.hbm [resolvable:$true] %s22
      %s24 = sshll.u32 [#allocation2], 4
      %s25 = int_to_ptr.vmem [resolvable:$true] %s24
      %30 = dma.hbm_to_vmem [thread:$0]  %s23, 128, %s25, [#allocation3], 64, 64, 4
    $region5: #{tpu_custom_call.1} parent=1 // pred_fallthru
      _
    // Predicated region
    $region6: #{tpu_custom_call.1} parent=1 // pred_check
      _
    $region7: #{tpu_custom_call.1} parent=1 // pred_check_branch
      %32 = sbr.rel (0) target = $region9
    $region8: #{tpu_custom_call.1} parent=1 // pred_region
      %34 = vsyncadd [#allocation6], 0
      %s35 = sshll.u32 %s1, 4
      %s36 = int_to_ptr.hbm [resolvable:$true] %s35
      %s37 = sshll.u32 [#allocation5], 4
      %s38 = int_to_ptr.vmem [resolvable:$true] %s37
      %43 = dma.hbm_to_vmem [thread:$0]  %s36, 1024, %s38, [#allocation6], 64, 64, 4
    $region9: #{tpu_custom_call.1} parent=1 // pred_fallthru
      _
    // Predicated region
    $region10: #{tpu_custom_call.1} parent=1 // pred_check
      _
    $region11: #{tpu_custom_call.1} parent=1 // pred_check_branch
      %45 = sbr.rel (0) target = $region13
    $region12: #{tpu_custom_call.1} parent=1 // pred_region
      _
    $region13: #{tpu_custom_call.1} parent=1 // pred_fallthru
      _
    // Predicated region
    $region14: #{tpu_custom_call.1} parent=1 // pred_check
      _
    $region15: #{tpu_custom_call.1} parent=1 // pred_check_branch
      %47 = sbr.rel (0) target = $region17
    $region16: #{tpu_custom_call.1} parent=1 // pred_region
      %49 = vsyncadd [#allocation6], 0
      %s50 = sshll.u32 %s3, 4
      %s51 = int_to_ptr.hbm [resolvable:$true] %s50
      %s52 = sshll.u32 [#allocation7], 4
      %s53 = int_to_ptr.vmem [resolvable:$true] %s52
      %58 = dma.hbm_to_vmem [thread:$0]  %s51, 1024, %s53, [#allocation6], 64, 64, 4
    $region17: #{tpu_custom_call.1} parent=1 // pred_fallthru
      _
    // Predicated region
    $region18: #{tpu_custom_call.1} parent=1 // pred_check
      _
    $region19: #{tpu_custom_call.1} parent=1 // pred_check_branch
      %60 = sbr.rel (0) target = $region21
    $region20: #{tpu_custom_call.1} parent=1 // pred_region
      _
    $region21: #{tpu_custom_call.1} parent=1 // pred_fallthru
      _
    // Predicated region
    $region22: #{tpu_custom_call.1} parent=1 // pred_check
      _
    $region23: #{tpu_custom_call.1} parent=1 // pred_check_branch
      %62 = sbr.rel (0) target = $region25
    $region24: #{tpu_custom_call.1} parent=1 // pred_region
      %64 = vsyncadd [#allocation9], 0
      %s65 = sshll.u32 %s5, 4
      %s66 = int_to_ptr.hbm [resolvable:$true] %s65
      %s67 = sshll.u32 [#allocation8], 4
      %s68 = int_to_ptr.vmem [resolvable:$true] %s67
      %73 = dma.hbm_to_vmem [thread:$0]  %s66, 1024, %s68, [#allocation9], 64, 64, 4
    $region25: #{tpu_custom_call.1} parent=1 // pred_fallthru
      _
    // Predicated region
    $region26: #{tpu_custom_call.1} parent=1 // pred_check
      _
    $region27: #{tpu_custom_call.1} parent=1 // pred_check_branch
      %75 = sbr.rel (0) target = $region29
    $region28: #{tpu_custom_call.1} parent=1 // pred_region
      _
    $region29: #{tpu_custom_call.1} parent=1 // pred_fallthru
      _
    // Predicated region
    $region30: #{tpu_custom_call.1} parent=1 // pred_check
      _
    $region31: #{tpu_custom_call.1} parent=1 // pred_check_branch
      %77 = sbr.rel (0) target = $region33
    $region32: #{tpu_custom_call.1} parent=1 // pred_region
      %79 = vsyncadd [#allocation9], 0
      %s80 = sshll.u32 %s7, 4
      %s81 = int_to_ptr.hbm [resolvable:$true] %s80
      %s82 = sshll.u32 [#allocation10], 4
      %s83 = int_to_ptr.vmem [resolvable:$true] %s82
      %88 = dma.hbm_to_vmem [thread:$0]  %s81, 1024, %s83, [#allocation9], 64, 64, 4
    $region33: #{tpu_custom_call.1} parent=1 // pred_fallthru
      _
    // Predicated region
    $region34: #{tpu_custom_call.1} parent=1 // pred_check
      _
    $region35: #{tpu_custom_call.1} parent=1 // pred_check_branch
      %90 = sbr.rel (0) target = $region37
    $region36: #{tpu_custom_call.1} parent=1 // pred_region
      _
    $region37: #{tpu_custom_call.1} parent=1 // pred_fallthru
      _
    // Predicated region
    $region38: #{tpu_custom_call.1} parent=1 // pred_check
      _
    $region39: #{tpu_custom_call.1} parent=1 // pred_check_branch
      %92 = sbr.rel (0) target = $region41
    $region40: #{tpu_custom_call.1} parent=1 // pred_region
      %94 = dma.done [#allocation3], 128
    $region41: #{tpu_custom_call.1} parent=1 // pred_fallthru
      _
    // Predicated region
    $region42: #{tpu_custom_call.1} parent=1 // pred_check
      _
    $region43: #{tpu_custom_call.1} parent=1 // pred_check_branch
      %96 = sbr.rel (0) target = $region45
    $region44: #{tpu_custom_call.1} parent=1 // pred_region
      %98 = dma.done [#allocation6], 1024
    $region45: #{tpu_custom_call.1} parent=1 // pred_fallthru
      _
    // Predicated region
    $region46: #{tpu_custom_call.1} parent=1 // pred_check
      _
    $region47: #{tpu_custom_call.1} parent=1 // pred_check_branch
      %100 = sbr.rel (0) target = $region49
    $region48: #{tpu_custom_call.1} parent=1 // pred_region
      %102 = dma.done [#allocation6], 1024
    $region49: #{tpu_custom_call.1} parent=1 // pred_fallthru
      _
    // Predicated region
    $region50: #{tpu_custom_call.1} parent=1 // pred_check
      _
    $region51: #{tpu_custom_call.1} parent=1 // pred_check_branch
      %104 = sbr.rel (0) target = $region53
    $region52: #{tpu_custom_call.1} parent=1 // pred_region
      %106 = dma.done [#allocation9], 1024
    $region53: #{tpu_custom_call.1} parent=1 // pred_fallthru
      _
    // Predicated region
    $region54: #{tpu_custom_call.1} parent=1 // pred_check
      _
    $region55: #{tpu_custom_call.1} parent=1 // pred_check_branch
      %108 = sbr.rel (0) target = $region57
    $region56: #{tpu_custom_call.1} parent=1 // pred_region
      %110 = dma.done [#allocation9], 1024
    $region57: #{tpu_custom_call.1} parent=1 // pred_fallthru
      _
    %v111 = vld [vmem:[#allocation2] sm:$0xf]
    %v112 = vld [vmem:[#allocation2 + $0x4] sm:$0xf]
    %v113 = vld [vmem:[#allocation5] sm:$0xf]
    %v114 = vld [vmem:[#allocation5 + $0x4] sm:$0xf]
    %v115 = vld [vmem:[#allocation5 + $0x8] sm:$0xf]
    %v116 = vld [vmem:[#allocation5 + $0xc] sm:$0xf]
    %v117 = vld [vmem:[#allocation5 + $0x10] sm:$0xf]
    %v118 = vld [vmem:[#allocation5 + $0x14] sm:$0xf]
    %v119 = vld [vmem:[#allocation5 + $0x18] sm:$0xf]
    %v120 = vld [vmem:[#allocation5 + $0x1c] sm:$0xf]
    %v121 = vld [vmem:[#allocation5 + $0x20] sm:$0xf]
    %v122 = vld [vmem:[#allocation5 + $0x24] sm:$0xf]
    %v123 = vld [vmem:[#allocation5 + $0x28] sm:$0xf]
    %v124 = vld [vmem:[#allocation5 + $0x2c] sm:$0xf]
    %v125 = vld [vmem:[#allocation5 + $0x30] sm:$0xf]
    %v126 = vld [vmem:[#allocation5 + $0x34] sm:$0xf]
    %v127 = vld [vmem:[#allocation5 + $0x38] sm:$0xf]
    %v128 = vld [vmem:[#allocation5 + $0x3c] sm:$0xf]
    %v129 = vld [vmem:[%s2] sm:$0x1]
    %v131 = vperm.slane %v129, 0
    %v135 = vunpack.c.l.b16 %v111
    %v136 = vunpack.c.l.b16 %v112
    %v137 = vpack.c.b16 %v136, %v135
    %v155 = vunpack.c.l.b16 %v113
    %v156 = vunpack.c.l.b16 %v114
    %v157 = vunpack.c.l.b16 %v115
    %v158 = vunpack.c.l.b16 %v116
    %v159 = vunpack.c.l.b16 %v117
    %v160 = vunpack.c.l.b16 %v118
    %v161 = vunpack.c.l.b16 %v119
    %v162 = vunpack.c.l.b16 %v120
    %v163 = vunpack.c.l.b16 %v121
    %v164 = vunpack.c.l.b16 %v122
    %v165 = vunpack.c.l.b16 %v123
    %v166 = vunpack.c.l.b16 %v124
    %v167 = vunpack.c.l.b16 %v125
    %v168 = vunpack.c.l.b16 %v126
    %v169 = vunpack.c.l.b16 %v127
    %v170 = vunpack.c.l.b16 %v128
    %v171 = vpack.c.b16 %v156, %v155
    %v172 = vpack.c.b16 %v158, %v157
    %v173 = vpack.c.b16 %v160, %v159
    %v174 = vpack.c.b16 %v162, %v161
    %v175 = vpack.c.b16 %v164, %v163
    %v176 = vpack.c.b16 %v166, %v165
    %v177 = vpack.c.b16 %v168, %v167
    %v178 = vpack.c.b16 %v170, %v169
    %187 = vmatpush.bf16.msra.mxu0 %v178
    %188 = vmatpush.bf16.msra.mxu0 %v177
    %189 = vmatpush.bf16.msra.mxu0 %v176
    %190 = vmatpush.bf16.msra.mxu0 %v175
    %191 = vmatpush.bf16.msra.mxu0 %v174
    %192 = vmatpush.bf16.msra.mxu0 %v173
    %193 = vmatpush.bf16.msra.mxu0 %v172
    %194 = vmatpush.bf16.msra.mxu0 %v171
    %195 = vmatmul.bf16.gmra.mxu0 %v137
    %v196 = vpop.f32.mrf.mxu0
    %v197 = vadd.f32 %v131, %v196
    %v198 = vpop.f32.mrf.mxu0
    %v199 = vadd.f32 %v131, %v198
    %200 = vdwg.mxu0
    %v201 = vpack.c.bf16 %v199, %v197
    %v202 = vld [vmem:[#allocation7] sm:$0xf]
    %v203 = vld [vmem:[#allocation7 + $0x4] sm:$0xf]
    %v204 = vld [vmem:[#allocation7 + $0x8] sm:$0xf]
    %v205 = vld [vmem:[#allocation7 + $0xc] sm:$0xf]
    %v206 = vld [vmem:[#allocation7 + $0x10] sm:$0xf]
    %v207 = vld [vmem:[#allocation7 + $0x14] sm:$0xf]
    %v208 = vld [vmem:[#allocation7 + $0x18] sm:$0xf]
    %v209 = vld [vmem:[#allocation7 + $0x1c] sm:$0xf]
    %v210 = vld [vmem:[#allocation7 + $0x20] sm:$0xf]
    %v211 = vld [vmem:[#allocation7 + $0x24] sm:$0xf]
    %v212 = vld [vmem:[#allocation7 + $0x28] sm:$0xf]
    %v213 = vld [vmem:[#allocation7 + $0x2c] sm:$0xf]
    %v214 = vld [vmem:[#allocation7 + $0x30] sm:$0xf]
    %v215 = vld [vmem:[#allocation7 + $0x34] sm:$0xf]
    %v216 = vld [vmem:[#allocation7 + $0x38] sm:$0xf]
    %v217 = vld [vmem:[#allocation7 + $0x3c] sm:$0xf]
    %v218 = vld [vmem:[%s4] sm:$0x1]
    %v220 = vperm.slane %v218, 0
    %v238 = vunpack.c.l.b16 %v202
    %v239 = vunpack.c.l.b16 %v203
    %v240 = vunpack.c.l.b16 %v204
    %v241 = vunpack.c.l.b16 %v205
    %v242 = vunpack.c.l.b16 %v206
    %v243 = vunpack.c.l.b16 %v207
    %v244 = vunpack.c.l.b16 %v208
    %v245 = vunpack.c.l.b16 %v209
    %v246 = vunpack.c.l.b16 %v210
    %v247 = vunpack.c.l.b16 %v211
    %v248 = vunpack.c.l.b16 %v212
    %v249 = vunpack.c.l.b16 %v213
    %v250 = vunpack.c.l.b16 %v214
    %v251 = vunpack.c.l.b16 %v215
    %v252 = vunpack.c.l.b16 %v216
    %v253 = vunpack.c.l.b16 %v217
    %v254 = vpack.c.b16 %v239, %v238
    %v255 = vpack.c.b16 %v241, %v240
    %v256 = vpack.c.b16 %v243, %v242
    %v257 = vpack.c.b16 %v245, %v244
    %v258 = vpack.c.b16 %v247, %v246
    %v259 = vpack.c.b16 %v249, %v248
    %v260 = vpack.c.b16 %v251, %v250
    %v261 = vpack.c.b16 %v253, %v252
    %270 = vmatpush.bf16.msra.mxu0 %v261
    %271 = vmatpush.bf16.msra.mxu0 %v260
    %272 = vmatpush.bf16.msra.mxu0 %v259
    %273 = vmatpush.bf16.msra.mxu0 %v258
    %274 = vmatpush.bf16.msra.mxu0 %v257
    %275 = vmatpush.bf16.msra.mxu0 %v256
    %276 = vmatpush.bf16.msra.mxu0 %v255
    %277 = vmatpush.bf16.msra.mxu0 %v254
    %278 = vmatmul.bf16.gmra.mxu0 %v201
    %v279 = vpop.f32.mrf.mxu0
    %v280 = vadd.f32 %v220, %v279
    %v281 = vpop.f32.mrf.mxu0
    %v282 = vadd.f32 %v220, %v281
    %283 = vdwg.mxu0
    %v284 = vmax.f32 %v280, 0.0
    %v285 = vmax.f32 %v282, 0.0
    %v286 = vpack.c.bf16 %v285, %v284
    %v287 = vld [vmem:[#allocation8] sm:$0xf]
    %v288 = vld [vmem:[#allocation8 + $0x4] sm:$0xf]
    %v289 = vld [vmem:[#allocation8 + $0x8] sm:$0xf]
    %v290 = vld [vmem:[#allocation8 + $0xc] sm:$0xf]
    %v291 = vld [vmem:[#allocation8 + $0x10] sm:$0xf]
    %v292 = vld [vmem:[#allocation8 + $0x14] sm:$0xf]
    %v293 = vld [vmem:[#allocation8 + $0x18] sm:$0xf]
    %v294 = vld [vmem:[#allocation8 + $0x1c] sm:$0xf]
    %v295 = vld [vmem:[#allocation8 + $0x20] sm:$0xf]
    %v296 = vld [vmem:[#allocation8 + $0x24] sm:$0xf]
    %v297 = vld [vmem:[#allocation8 + $0x28] sm:$0xf]
    %v298 = vld [vmem:[#allocation8 + $0x2c] sm:$0xf]
    %v299 = vld [vmem:[#allocation8 + $0x30] sm:$0xf]
    %v300 = vld [vmem:[#allocation8 + $0x34] sm:$0xf]
    %v301 = vld [vmem:[#allocation8 + $0x38] sm:$0xf]
    %v302 = vld [vmem:[#allocation8 + $0x3c] sm:$0xf]
    %v303 = vld [vmem:[%s6] sm:$0x1]
    %v305 = vperm.slane %v303, 0
    %v323 = vunpack.c.l.b16 %v287
    %v324 = vunpack.c.l.b16 %v288
    %v325 = vunpack.c.l.b16 %v289
    %v326 = vunpack.c.l.b16 %v290
    %v327 = vunpack.c.l.b16 %v291
    %v328 = vunpack.c.l.b16 %v292
    %v329 = vunpack.c.l.b16 %v293
    %v330 = vunpack.c.l.b16 %v294
    %v331 = vunpack.c.l.b16 %v295
    %v332 = vunpack.c.l.b16 %v296
    %v333 = vunpack.c.l.b16 %v297
    %v334 = vunpack.c.l.b16 %v298
    %v335 = vunpack.c.l.b16 %v299
    %v336 = vunpack.c.l.b16 %v300
    %v337 = vunpack.c.l.b16 %v301
    %v338 = vunpack.c.l.b16 %v302
    %v339 = vpack.c.b16 %v324, %v323
    %v340 = vpack.c.b16 %v326, %v325
    %v341 = vpack.c.b16 %v328, %v327
    %v342 = vpack.c.b16 %v330, %v329
    %v343 = vpack.c.b16 %v332, %v331
    %v344 = vpack.c.b16 %v334, %v333
    %v345 = vpack.c.b16 %v336, %v335
    %v346 = vpack.c.b16 %v338, %v337
    %355 = vmatpush.bf16.msra.mxu0 %v346
    %356 = vmatpush.bf16.msra.mxu0 %v345
    %357 = vmatpush.bf16.msra.mxu0 %v344
    %358 = vmatpush.bf16.msra.mxu0 %v343
    %359 = vmatpush.bf16.msra.mxu0 %v342
    %360 = vmatpush.bf16.msra.mxu0 %v341
    %361 = vmatpush.bf16.msra.mxu0 %v340
    %362 = vmatpush.bf16.msra.mxu0 %v339
    %363 = vmatmul.bf16.gmra.mxu0 %v286
    %v364 = vpop.f32.mrf.mxu0
    %v365 = vadd.f32 %v305, %v364
    %v366 = vpop.f32.mrf.mxu0
    %v367 = vadd.f32 %v305, %v366
    %368 = vdwg.mxu0
    %v369 = vmax.f32 %v365, 0.0
    %v370 = vmax.f32 %v367, 0.0
    %v371 = vpack.c.bf16 %v370, %v369
    %v372 = vld [vmem:[#allocation10] sm:$0xf]
    %v373 = vld [vmem:[#allocation10 + $0x4] sm:$0xf]
    %v374 = vld [vmem:[#allocation10 + $0x8] sm:$0xf]
    %v375 = vld [vmem:[#allocation10 + $0xc] sm:$0xf]
    %v376 = vld [vmem:[#allocation10 + $0x10] sm:$0xf]
    %v377 = vld [vmem:[#allocation10 + $0x14] sm:$0xf]
    %v378 = vld [vmem:[#allocation10 + $0x18] sm:$0xf]
    %v379 = vld [vmem:[#allocation10 + $0x1c] sm:$0xf]
    %v380 = vld [vmem:[#allocation10 + $0x20] sm:$0xf]
    %v381 = vld [vmem:[#allocation10 + $0x24] sm:$0xf]
    %v382 = vld [vmem:[#allocation10 + $0x28] sm:$0xf]
    %v383 = vld [vmem:[#allocation10 + $0x2c] sm:$0xf]
    %v384 = vld [vmem:[#allocation10 + $0x30] sm:$0xf]
    %v385 = vld [vmem:[#allocation10 + $0x34] sm:$0xf]
    %v386 = vld [vmem:[#allocation10 + $0x38] sm:$0xf]
    %v387 = vld [vmem:[#allocation10 + $0x3c] sm:$0xf]
    %v388 = vld [vmem:[%s8] sm:$0x1]
    %v390 = vperm.slane %v388, 0
    %v408 = vunpack.c.l.b16 %v372
    %v409 = vunpack.c.l.b16 %v373
    %v410 = vunpack.c.l.b16 %v374
    %v411 = vunpack.c.l.b16 %v375
    %v412 = vunpack.c.l.b16 %v376
    %v413 = vunpack.c.l.b16 %v377
    %v414 = vunpack.c.l.b16 %v378
    %v415 = vunpack.c.l.b16 %v379
    %v416 = vunpack.c.l.b16 %v380
    %v417 = vunpack.c.l.b16 %v381
    %v418 = vunpack.c.l.b16 %v382
    %v419 = vunpack.c.l.b16 %v383
    %v420 = vunpack.c.l.b16 %v384
    %v421 = vunpack.c.l.b16 %v385
    %v422 = vunpack.c.l.b16 %v386
    %v423 = vunpack.c.l.b16 %v387
    %v424 = vpack.c.b16 %v409, %v408
    %v425 = vpack.c.b16 %v411, %v410
    %v426 = vpack.c.b16 %v413, %v412
    %v427 = vpack.c.b16 %v415, %v414
    %v428 = vpack.c.b16 %v417, %v416
    %v429 = vpack.c.b16 %v419, %v418
    %v430 = vpack.c.b16 %v421, %v420
    %v431 = vpack.c.b16 %v423, %v422
    %440 = vmatpush.bf16.msra.mxu0 %v431
    %441 = vmatpush.bf16.msra.mxu0 %v430
    %442 = vmatpush.bf16.msra.mxu0 %v429
    %443 = vmatpush.bf16.msra.mxu0 %v428
    %444 = vmatpush.bf16.msra.mxu0 %v427
    %445 = vmatpush.bf16.msra.mxu0 %v426
    %446 = vmatpush.bf16.msra.mxu0 %v425
    %447 = vmatpush.bf16.msra.mxu0 %v424
    %448 = vmatmul.bf16.gmra.mxu0 %v371
    %v449 = vpop.f32.mrf.mxu0
    %v450 = vadd.f32 %v390, %v449
    %v451 = vpop.f32.mrf.mxu0
    %v452 = vadd.f32 %v390, %v451
    %453 = vdwg.mxu0
    %454 = vst [vmem:[#allocation11] sm:$0xff] %v450
    %455 = vst [vmem:[#allocation11 + $0x8] sm:$0xff] %v452
    // Predicated region
    $region58: #{tpu_custom_call.1} parent=1 // pred_check
      _
    $region59: #{tpu_custom_call.1} parent=1 // pred_check_branch
      %457 = sbr.rel (0) target = $region61
    $region60: #{tpu_custom_call.1} parent=1 // pred_region
      %459 = vsyncadd [#allocation4], 0
      %s460 = sshll.u32 [#allocation11], 4
      %s461 = int_to_ptr.vmem [resolvable:$true] %s460
      %s462 = sshll.u32 %s9, 4
      %s463 = int_to_ptr.hbm [resolvable:$true] %s462
      %468 = dma.vmem_to_hbm [thread:$0]  %s461, 256, %s463, [#allocation4], 128, 128, 8
    $region61: #{tpu_custom_call.1} parent=1 // pred_fallthru
      _
    // Predicated region
    $region62: #{tpu_custom_call.1} parent=1 // pred_check
      _
    $region63: #{tpu_custom_call.1} parent=1 // pred_check_branch
      %470 = sbr.rel (0) target = $region65
    $region64: #{tpu_custom_call.1} parent=1 // pred_region
      %472 = dma.done [#allocation4], 256
    $region65: #{tpu_custom_call.1} parent=1 // pred_fallthru
      _
    %473 = vsyncpa [#allocation3], 1
    %474 = vsyncpa [#allocation6], 1
    %475 = vsyncpa [#allocation9], 1
    %476 = vsyncpa [#allocation4], 1

</llo_original>
